<compile_context>
chip_gen: v7x
topology: tpu7x:2x2x1
jax: 0.10.0
libtpu: 0.0.40
codegen_flags: <defaults>
</compile_context>

<pallas_src>
import math

import numpy as np
import jax
import jax.numpy as jnp
from jax.experimental import pallas as pl
from jax.experimental.pallas import tpu as pltpu


def _bbox_sincos_kernel(x_ref, proj_ref, phase_ref, factor_ref, o_ref):
    # x_ref:      (TM, R*D)       packed bbox coordinates (R boxes per row)
    # proj_ref:   (R*D, R*D*2F)   block-diagonal replication * (inv_freq/scale)
    # phase_ref:  (1, R*D*2F)     0.0 on sin columns, pi/2 on cos columns
    # factor_ref: (1,)  SMEM      learnable scalar factor
    # o_ref:      (TM, R*D*2F)
    angles = jnp.dot(x_ref[...].astype(jnp.float32), proj_ref[...],
                     preferred_element_type=jnp.float32)
    out = jnp.sin(angles + phase_ref[...]) * factor_ref[0]
    o_ref[...] = out.astype(o_ref.dtype)


def make_bbox_pos_encoding_params(channels=3, dim=4, factor_ratio=1.0):
    """Deterministic re-creation of the module's __init__ buffers/params."""
    channels = int(np.ceil(channels / (dim * 2)) * dim)
    inv_freq = 1.0 / 10 ** (np.arange(0, channels, dim, dtype=np.float32) / channels)
    factor = np.ones((1,), dtype=np.float32) * factor_ratio
    return inv_freq.astype(np.float32), factor.astype(np.float32)


def _pack_lanes():
    """Minor-dim packing width of the input tile.

    256 on v6e/v7x (fills the 256-deep MXU, halves grid steps; those chips are
    HBM-bound here so the extra block-diag FLOPs are free).  128 on v5e or
    unknown chips, where the f32 matmul is near parity with the HBM roofline.
    """
    try:
        kind = jax.devices()[0].device_kind.lower()
    except Exception:
        return 128
    return 256 if any(t in kind for t in ("v6", "v7", "7x")) else 128


def _build_tables(inv_freq, scaling_ratio, D, R):
    """Block-diagonal projection (folds inv_freq and 1/scale) + phase row."""
    inv_np = np.asarray(inv_freq, dtype=np.float32)
    F = int(inv_np.shape[0])
    out_d = D * 2 * F
    in_w, out_w = R * D, R * out_d
    freq_row = np.concatenate([inv_np, inv_np]) / float(scaling_ratio)   # (2F,)
    proj = np.zeros((in_w, out_w), dtype=np.float32)
    for r in range(R):
        for d in range(D):
            col = r * out_d + d * 2 * F
            proj[r * D + d, col:col + 2 * F] = freq_row
    phase = np.tile(
        np.concatenate([np.zeros(F, np.float32),
                        np.full(F, np.pi / 2.0, np.float32)]),
        R * D)[None, :].astype(np.float32)                               # (1, out_w)
    return proj, phase


def bbox_pos_encoding(x, inv_freq, factor, scaling_ratio=128.0, *,
                      tm=2048, min_grid_steps=4, out_dtype=None, lanes=None):
    orig_shape = x.shape
    D = int(orig_shape[-1])
    M = int(np.prod(orig_shape[:-1])) if len(orig_shape) > 1 else 1
    F = int(inv_freq.shape[0])
    out_d = D * 2 * F
    out_dtype = x.dtype if out_dtype is None else out_dtype

    lanes = _pack_lanes() if lanes is None else int(lanes)
    R = lanes // math.gcd(D, lanes)          # R*D is a multiple of `lanes`
    in_w, out_w = R * D, R * out_d

    proj, phase = _build_tables(inv_freq, scaling_ratio, D, R)

    # Pack R boxes per kernel row.  Fast path (large M with M % R == 0):
    # no pad and no post-slice -> no extra HBM re-streaming in the wrapper.
    rows = pl.cdiv(M, R)
    rows_alloc = max(rows, 8)                # keep >=8 sublanes for tiny inputs
    M_pack = rows_alloc * R
    x2 = x.reshape(M, D)
    if M_pack != M:                          # small pad (< R boxes, or one 8-row slab)
        x2 = jnp.pad(x2, ((0, M_pack - M), (0, 0)))
    x_packed = x2.reshape(rows_alloc, in_w)  # contiguous reshape, free

    # Row tile: multiple of 8, capped at `tm`, shrunk so the grid has at least
    # `min_grid_steps` steps (pipelining overlap + v7x 2-TC megacore split).
    tm = max(8, (int(tm) // 8) * 8)
    tm_eff = min(tm, max(8, ((pl.cdiv(rows_alloc, max(1, min_grid_steps)) + 7) // 8) * 8))
    grid = (pl.cdiv(rows_alloc, tm_eff),)    # ragged last block: tail writes dropped

    out = pl.pallas_call(
        _bbox_sincos_kernel,
        out_shape=jax.ShapeDtypeStruct((rows_alloc, out_w), out_dtype),
        grid_spec=pltpu.PrefetchScalarGridSpec(
            num_scalar_prefetch=0,
            grid=grid,
            in_specs=[
                pl.BlockSpec((tm_eff, in_w), lambda i: (i, 0)),
                pl.BlockSpec((in_w, out_w), lambda i: (0, 0)),
                pl.BlockSpec((1, out_w), lambda i: (0, 0)),
                pl.BlockSpec(memory_space=pltpu.MemorySpace.SMEM),
            ],
            out_specs=pl.BlockSpec((tm_eff, out_w), lambda i: (i, 0)),
        ),
        compiler_params=pltpu.CompilerParams(
            dimension_semantics=("parallel",)),
    )(x_packed, jnp.asarray(proj), jnp.asarray(phase),
      jnp.asarray(factor, dtype=jnp.float32))

    out_boxes = out.reshape(M_pack, out_d)   # contiguous reshape, free
    if M_pack != M:
        out_boxes = out_boxes[:M]            # only taken on the padded path
    return out_boxes.reshape(*orig_shape[:-1], out_d)


def bbox_pos_encoding_ref(x, inv_freq, factor, scaling_ratio=128.0):
    """Pure-JAX reference matching the PyTorch forward (eval semantics)."""
    x = x / scaling_ratio
    pe = x[..., None] * inv_freq[None, :]                # matmul(x[...,None], inv_freq[None,:])
    emb = jnp.concatenate([jnp.sin(pe), jnp.cos(pe)], axis=-1)
    emb = emb.reshape(*emb.shape[:-2], -1)               # flatten(start_dim=-2)
    return emb * factor


if __name__ == "__main__":
    key = jax.random.PRNGKey(0)
    inv_freq, factor = make_bbox_pos_encoding_params(channels=3, dim=4, factor_ratio=1.0)
    inv_freq_j = jnp.asarray(inv_freq)
    factor_j = jnp.asarray(factor)

    cases = [
        (2, 8, 4),     # tiny: padded path, single-step grid
        (4, 512, 4),   # fast path (no pad / no slice), >=4-step grid
        (5, 333, 4),   # padded path with a ragged last grid block
    ]
    for shape in cases:
        key, sub = jax.random.split(key)
        x = jax.random.uniform(sub, shape, dtype=jnp.float32,
                               minval=0.0, maxval=128.0)
        out = jax.block_until_ready(
            bbox_pos_encoding(x, inv_freq_j, factor_j, scaling_ratio=128.0))
        ref = bbox_pos_encoding_ref(x, inv_freq_j, factor_j, scaling_ratio=128.0)
        assert out.shape == ref.shape, (shape, out.shape, ref.shape)
        np.testing.assert_allclose(np.asarray(out), np.asarray(ref),
                                   rtol=1e-5, atol=1e-5)
    print("KERNEL_OK")
</pallas_src>

<mosaic_0001>
module attributes {stable_mosaic.version = 11 : i64} {
  func.func @_bbox_sincos_kernel(%arg0: i32, %arg1: memref<8x128xf32, #tpu.memory_space<vmem>>, %arg2: memref<128x256xf32, #tpu.memory_space<vmem>>, %arg3: memref<1x256xf32, #tpu.memory_space<vmem>>, %arg4: memref<1xf32, #tpu.memory_space<smem>>, %arg5: memref<8x256xf32, #tpu.memory_space<vmem>>) attributes {dimension_semantics = [#tpu.dimension_semantics<parallel>], iteration_bounds = array<i64: 1>, scalar_prefetch = 0 : i64, scratch_operands = 0 : i64, tpu.core_type = #tpu.core_type<tc>, window_params = [{transform_indices = @transform_0, window_bounds = array<i64: 8, 128>}, {pipeline_mode = #tpu.pipeline_mode<synchronous>, transform_indices = @transform_1, window_bounds = array<i64: 128, 256>}, {pipeline_mode = #tpu.pipeline_mode<synchronous>, transform_indices = @transform_2, window_bounds = array<i64: 1, 256>}, {transform_indices = @transform_3, window_bounds = array<i64: 1>}, {transform_indices = @transform_4, window_bounds = array<i64: 8, 256>}]} {
    %c0 = arith.constant 0 : index
    %c0_0 = arith.constant 0 : index
    %0 = vector.load %arg1[%c0, %c0_0] : memref<8x128xf32, #tpu.memory_space<vmem>>, vector<8x128xf32>
    %c0_1 = arith.constant 0 : index
    %c0_2 = arith.constant 0 : index
    %1 = vector.load %arg2[%c0_1, %c0_2] : memref<128x256xf32, #tpu.memory_space<vmem>>, vector<128x256xf32>
    %cst = arith.constant dense<0.000000e+00> : vector<8x256xf32>
    %2 = tpu.matmul %0, %1, %cst {dimension_numbers = #tpu.dot_dimension_numbers<[1], [0], [0], [1], [0, 0, 1, 1], [], []>} : vector<8x128xf32>, vector<128x256xf32>, vector<8x256xf32> -> vector<8x256xf32>
    %c0_3 = arith.constant 0 : index
    %c0_4 = arith.constant 0 : index
    %3 = vector.load %arg3[%c0_3, %c0_4] : memref<1x256xf32, #tpu.memory_space<vmem>>, vector<1x256xf32>
    %4 = vector.broadcast %3 : vector<1x256xf32> to vector<8x256xf32>
    %5 = arith.addf %2, %4 : vector<8x256xf32>
    %6 = math.sin %5 : vector<8x256xf32>
    %c0_5 = arith.constant 0 : index
    %7 = memref.load %arg4[%c0_5] : memref<1xf32, #tpu.memory_space<smem>>
    %8 = vector.broadcast %7 : f32 to vector<8x256xf32>
    %9 = arith.mulf %6, %8 : vector<8x256xf32>
    %c0_6 = arith.constant 0 : index
    %c0_7 = arith.constant 0 : index
    %10 = vector.load %arg5[%c0_6, %c0_7] : memref<8x256xf32, #tpu.memory_space<vmem>>, vector<8x256xf32>
    tpu.vector_store %arg5[%c0_6, %c0_7], %9 {strides = array<i32>} : memref<8x256xf32, #tpu.memory_space<vmem>>, vector<8x256xf32>,
    return
  }
  func.func @transform_0(%arg0: i32) -> (i32, i32) {
    %c0_i32 = arith.constant 0 : i32
    %c0_i32_0 = arith.constant 0 : i32
    return %arg0, %c0_i32 : i32, i32
  }
  func.func @transform_1(%arg0: i32) -> (i32, i32) {
    %c0_i32 = arith.constant 0 : i32
    %c0_i32_0 = arith.constant 0 : i32
    %c0_i32_1 = arith.constant 0 : i32
    return %c0_i32, %c0_i32_0 : i32, i32
  }
  func.func @transform_2(%arg0: i32) -> (i32, i32) {
    %c0_i32 = arith.constant 0 : i32
    %c0_i32_0 = arith.constant 0 : i32
    %c0_i32_1 = arith.constant 0 : i32
    return %c0_i32, %c0_i32_0 : i32, i32
  }
  func.func @transform_3(%arg0: i32) -> i32 {
    %c0_i32 = arith.constant 0 : i32
    %c0_i32_0 = arith.constant 0 : i32
    return %c0_i32 : i32
  }
  func.func @transform_4(%arg0: i32) -> (i32, i32) {
    %c0_i32 = arith.constant 0 : i32
    %c0_i32_0 = arith.constant 0 : i32
    return %arg0, %c0_i32 : i32, i32
  }
}

</mosaic_0001>

<llo_original>
// kernel: tpu_custom_call.1
$region0: #{tpu_custom_call.1}
  #allocation0 [shape = 'u32[]', space=smem, size = 0x4, offset = 0x4, fixed_abs, tag = 'smem constant byte address 0x4 - core index']
  #allocation1 [shape = 'u32[144,128]{1,0:T(1,128)}', space=vmem, size = 0x12000, scoped, tag = 'internal scratch']
  #allocation2 [shape = 'f32[1]{0:T(128)S(6)}', space=smem, size = 0x200, scoped, tag = 'scoped memory for tpu_custom_call.1']
  %s0 = inlined_call_operand.hbm [shape: f32[8,128], index: 0, kind: input, shape index: {}]
  %s1 = inlined_call_operand.hbm [shape: f32[128,256], index: 1, kind: input, shape index: {}]
  %s2 = inlined_call_operand.vmem [shape: f32[1,256], index: 2, kind: input, shape index: {}]
  %s3 = inlined_call_operand.<no memory space> [shape: f32[1], index: 3, kind: input, shape index: {}]
  %s4 = inlined_call_operand.hbm [shape: f32[8,256], index: 4, kind: output, shape index: {}]
  %s5 = sld [smem:[#allocation0]]
  $region34: #{tpu_custom_call.1} parent=0
    _
  %s7 = ssub.s32 1, %s5
  %s8 = scalar_select 0, %s7, %s5
  %9 = sst [smem:[#allocation2]] %s3
  $region1: #{tpu_custom_call.1} parent=0
    #allocation3 [shape = 'u8[4096]{0}', space=vmem, size = 0x1000, scoped, tag = 'input window, operand 0, single buffered']
    #allocation4 [shape = 's32[1]{0}', space=sflag, size = 0x4, scoped, tag = 'scoped memory for tpu_custom_call.1']
    #allocation5 [shape = 's32[1]{0}', space=sflag, size = 0x4, scoped, tag = 'scoped memory for tpu_custom_call.1']
    #allocation6 [shape = 'u8[131072]{0}', space=vmem, size = 0x20000, scoped, tag = 'input window, operand 1, single buffered']
    #allocation7 [shape = 's32[1]{0}', space=sflag, size = 0x4, scoped, tag = 'scoped memory for tpu_custom_call.1']
    #allocation8 [shape = 'u8[8192]{0}', space=vmem, size = 0x2000, scoped, tag = 'output window, operand 0, single buffered']
    %10 = vsyncpa [#allocation4], 0
    %11 = vsyncpa [#allocation7], 0
    %12 = vsyncpa [#allocation5], 0
    // Predicated region
    $region2: #{tpu_custom_call.1} parent=1 // pred_check
      _
    $region3: #{tpu_custom_call.1} parent=1 // pred_check_branch
      %14 = sbr.rel (0) target = $region5
    $region4: #{tpu_custom_call.1} parent=1 // pred_region
      %s16 = ssub.s32 128, 128
      %17 = vsyncadd [#allocation4], %s16
      %s19 = sshll.u32 [#allocation3], 4
      %s20 = int_to_ptr.vmem [resolvable:$true] %s19
      %22 = dma.hbm_to_vmem [thread:$0]  %s0, 128, %s20, [#allocation4]
    $region5: #{tpu_custom_call.1} parent=1 // pred_fallthru
      _
    // Predicated region
    $region6: #{tpu_custom_call.1} parent=1 // pred_check
      _
    $region7: #{tpu_custom_call.1} parent=1 // pred_check_branch
      %24 = sbr.rel (0) target = $region9
    $region8: #{tpu_custom_call.1} parent=1 // pred_region
      %s26 = ssub.s32 4096, 4096
      %27 = vsyncadd [#allocation7], %s26
      %s28 = sshll.u32 [#allocation6], 4
      %s29 = int_to_ptr.vmem [resolvable:$true] %s28
      %34 = dma.hbm_to_vmem [thread:$0]  %s1, 4096, %s29, [#allocation7], 256, 256, 16
    $region9: #{tpu_custom_call.1} parent=1 // pred_fallthru
      _
    // Predicated region
    $region10: #{tpu_custom_call.1} parent=1 // pred_check
      _
    $region11: #{tpu_custom_call.1} parent=1 // pred_check_branch
      %36 = sbr.rel (0) target = $region13
    $region12: #{tpu_custom_call.1} parent=1 // pred_region
      _
    $region13: #{tpu_custom_call.1} parent=1 // pred_fallthru
      _
    // Predicated region
    $region14: #{tpu_custom_call.1} parent=1 // pred_check
      _
    $region15: #{tpu_custom_call.1} parent=1 // pred_check_branch
      %38 = sbr.rel (0) target = $region17
    $region16: #{tpu_custom_call.1} parent=1 // pred_region
      _
    $region17: #{tpu_custom_call.1} parent=1 // pred_fallthru
      _
    // Predicated region
    $region18: #{tpu_custom_call.1} parent=1 // pred_check
      _
    $region19: #{tpu_custom_call.1} parent=1 // pred_check_branch
      %40 = sbr.rel (0) target = $region21
    $region20: #{tpu_custom_call.1} parent=1 // pred_region
      %41 = dma.done [#allocation4], 128
    $region21: #{tpu_custom_call.1} parent=1 // pred_fallthru
      _
    // Predicated region
    $region22: #{tpu_custom_call.1} parent=1 // pred_check
      _
    $region23: #{tpu_custom_call.1} parent=1 // pred_check_branch
      %43 = sbr.rel (0) target = $region25
    $region24: #{tpu_custom_call.1} parent=1 // pred_region
      %44 = dma.done [#allocation7], 4096
    $region25: #{tpu_custom_call.1} parent=1 // pred_fallthru
      _
    %v45 = vld [vmem:[#allocation3] sm:$0xff]
    %v46 = vld [vmem:[#allocation6] sm:$0xff]
    %v47 = vld [vmem:[#allocation6 + $0x8] sm:$0xff]
    %v48 = vld [vmem:[#allocation6 + $0x10] sm:$0xff]
    %v49 = vld [vmem:[#allocation6 + $0x18] sm:$0xff]
    %v50 = vld [vmem:[#allocation6 + $0x20] sm:$0xff]
    %v51 = vld [vmem:[#allocation6 + $0x28] sm:$0xff]
    %v52 = vld [vmem:[#allocation6 + $0x30] sm:$0xff]
    %v53 = vld [vmem:[#allocation6 + $0x38] sm:$0xff]
    %v54 = vld [vmem:[#allocation6 + $0x40] sm:$0xff]
    %v55 = vld [vmem:[#allocation6 + $0x48] sm:$0xff]
    %v56 = vld [vmem:[#allocation6 + $0x50] sm:$0xff]
    %v57 = vld [vmem:[#allocation6 + $0x58] sm:$0xff]
    %v58 = vld [vmem:[#allocation6 + $0x60] sm:$0xff]
    %v59 = vld [vmem:[#allocation6 + $0x68] sm:$0xff]
    %v60 = vld [vmem:[#allocation6 + $0x70] sm:$0xff]
    %v61 = vld [vmem:[#allocation6 + $0x78] sm:$0xff]
    %v62 = vld [vmem:[#allocation6 + $0x80] sm:$0xff]
    %v63 = vld [vmem:[#allocation6 + $0x88] sm:$0xff]
    %v64 = vld [vmem:[#allocation6 + $0x90] sm:$0xff]
    %v65 = vld [vmem:[#allocation6 + $0x98] sm:$0xff]
    %v66 = vld [vmem:[#allocation6 + $0xa0] sm:$0xff]
    %v67 = vld [vmem:[#allocation6 + $0xa8] sm:$0xff]
    %v68 = vld [vmem:[#allocation6 + $0xb0] sm:$0xff]
    %v69 = vld [vmem:[#allocation6 + $0xb8] sm:$0xff]
    %v70 = vld [vmem:[#allocation6 + $0xc0] sm:$0xff]
    %v71 = vld [vmem:[#allocation6 + $0xc8] sm:$0xff]
    %v72 = vld [vmem:[#allocation6 + $0xd0] sm:$0xff]
    %v73 = vld [vmem:[#allocation6 + $0xd8] sm:$0xff]
    %v74 = vld [vmem:[#allocation6 + $0xe0] sm:$0xff]
    %v75 = vld [vmem:[#allocation6 + $0xe8] sm:$0xff]
    %v76 = vld [vmem:[#allocation6 + $0xf0] sm:$0xff]
    %v77 = vld [vmem:[#allocation6 + $0xf8] sm:$0xff]
    %v78 = vld [vmem:[%s2] sm:$0x3]
    %v80 = vlaneseq
    %v81 = vshrl.u32 %v80, 7
    %v82 = vsub.s32 0, %v81
    %v83 = vrot.slane %v78, %v82
    %v84 = vlaneseq
    %v85 = vshrl.u32 %v84, 7
    %v86 = vsub.s32 1, %v85
    %v87 = vrot.slane %v78, %v86
    %90 = vmatprep.subr.mxu0 %v47
    %91 = vmatpush1.msra.mxu0 %v46
    %92 = vmatprep.subr.mxu0 %v49
    %93 = vmatpush1.msra.mxu0 %v48
    %94 = vmatprep.subr.mxu0 %v51
    %95 = vmatpush1.msra.mxu0 %v50
    %96 = vmatprep.subr.mxu0 %v53
    %97 = vmatpush1.msra.mxu0 %v52
    %98 = vmatprep.subr.mxu0 %v55
    %99 = vmatpush1.msra.mxu0 %v54
    %100 = vmatprep.subr.mxu0 %v57
    %101 = vmatpush1.msra.mxu0 %v56
    %102 = vmatprep.subr.mxu0 %v59
    %103 = vmatpush1.msra.mxu0 %v58
    %104 = vmatprep.subr.mxu0 %v61
    %105 = vmatpush1.msra.mxu0 %v60
    %106 = vmatprep.subr.mxu0 %v63
    %107 = vmatpush1.msra.mxu0 %v62
    %108 = vmatprep.subr.mxu0 %v65
    %109 = vmatpush1.msra.mxu0 %v64
    %110 = vmatprep.subr.mxu0 %v67
    %111 = vmatpush1.msra.mxu0 %v66
    %112 = vmatprep.subr.mxu0 %v69
    %113 = vmatpush1.msra.mxu0 %v68
    %114 = vmatprep.subr.mxu0 %v71
    %115 = vmatpush1.msra.mxu0 %v70
    %116 = vmatprep.subr.mxu0 %v73
    %117 = vmatpush1.msra.mxu0 %v72
    %118 = vmatprep.subr.mxu0 %v75
    %119 = vmatpush1.msra.mxu0 %v74
    %120 = vmatprep.subr.mxu0 %v77
    %121 = vmatpush1.msra.mxu0 %v76
    %122 = vmatprep.subr.mxu0 0.0
    %123 = vmatpush1.msra.mxu0 0.0
    %124 = vmatprep.subr.mxu0 0.0
    %125 = vmatpush1.msra.mxu0 0.0
    %126 = vmatprep.subr.mxu0 0.0
    %127 = vmatpush1.msra.mxu0 0.0
    %128 = vmatprep.subr.mxu0 0.0
    %129 = vmatpush1.msra.mxu0 0.0
    %130 = vmatprep.subr.mxu0 0.0
    %131 = vmatpush1.msra.mxu0 0.0
    %132 = vmatprep.subr.mxu0 0.0
    %133 = vmatpush1.msra.mxu0 0.0
    %134 = vmatprep.subr.mxu0 0.0
    %135 = vmatpush1.msra.mxu0 0.0
    %136 = vmatprep.subr.mxu0 0.0
    %137 = vmatpush1.msra.mxu0 0.0
    %138 = vmatprep.subr.mxu0 0.0
    %139 = vmatpush1.msra.mxu0 0.0
    %140 = vmatprep.subr.mxu0 0.0
    %141 = vmatpush1.msra.mxu0 0.0
    %142 = vmatprep.subr.mxu0 0.0
    %143 = vmatpush1.msra.mxu0 0.0
    %144 = vmatprep.subr.mxu0 0.0
    %145 = vmatpush1.msra.mxu0 0.0
    %146 = vmatprep.subr.mxu0 0.0
    %147 = vmatpush1.msra.mxu0 0.0
    %148 = vmatprep.subr.mxu0 0.0
    %149 = vmatpush1.msra.mxu0 0.0
    %150 = vmatprep.subr.mxu0 0.0
    %151 = vmatpush1.msra.mxu0 0.0
    %152 = vmatprep.subr.mxu0 0.0
    %153 = vmatpush1.msra.mxu0 0.0
    %154 = vmatprep.mubr.f32.mxu0 0.0
    %155 = vmatmul.mubr.f32.gmra.mrb[0].mxu0 %v45
    %v156 = vpop.f32.mrb[0].mxu0
    %v157 = vadd.f32 %v83, %v156
    %v158 = vpop.f32.mrb[0].mxu0
    %v159 = vadd.f32 %v87, %v158
    %160 = vdwg.mxu0
    %v161 = vand.u32 2147483647, %v157
    %vm162 = vcmp.le.f32.partialorder %v161, 0.7853982
    %vm163 = vcmp.lt.s32.totalorder %v157, 0
    %v164 = vand.u32 %v157, 2139095040
    %v165 = vshrl.u32 %v164, 23
    %v166 = vsub.s32 %v165, 127
    %v167 = vand.u32 2147483647, %v157
    %v168 = vand.u32 %v167, 8388607
    %v169 = vor.u32 %v168, 8388608
    %v170 = vsub.s32 0, %v169
    %v171 = vadd.s32 %v166, 1
    %vm172 = vcmp.gt.s32.totalorder %v171, 0
    %v173 = vsel %vm172, %v171, 0
    %v174 = vshrl.u32 %v173, 5
    %v175 = vand.u32 %v173, 31
    %v176 = vsub.s32 32, %v175
    %v177 = vshrl.u32 683565275, %v176
    %v178 = vshll.u32 683565275, %v175
    %v179 = vshrl.u32 2475754826, %v176
    %v180 = vor.u32 %v178, %v179
    %v181 = vshll.u32 2475754826, %v175
    %v182 = vshrl.u32 2131351028, %v176
    %v183 = vor.u32 %v181, %v182
    %v184 = vshll.u32 2131351028, %v175
    %v185 = vshrl.u32 2102212464, %v176
    %v186 = vor.u32 %v184, %v185
    %v187 = vshll.u32 2102212464, %v175
    %v188 = vshrl.u32 920167782, %v176
    %v189 = vor.u32 %v187, %v188
    %v190 = vshll.u32 920167782, %v175
    %v191 = vshrl.u32 1326507024, %v176
    %v192 = vor.u32 %v190, %v191
    %vm193 = vcmp.lt.s32.totalorder %v174, 1
    %vm194 = vcmp.lt.s32.totalorder %v174, 2
    %vm195 = vcmp.lt.s32.totalorder %v174, 3
    %vm196 = vcmp.lt.s32.totalorder %v174, 4
    %v197 = vsel %vm193, %v177, %v180
    %v198 = vsel %vm196, %v186, 2102212464
    %v199 = vsel %vm195, %v183, %v198
    %v200 = vsel %vm194, %v197, %v199
    %v201 = vsel %vm193, %v180, %v183
    %v202 = vsel %vm196, %v189, 920167782
    %v203 = vsel %vm195, %v186, %v202
    %v204 = vsel %vm194, %v201, %v203
    %v205 = vsel %vm193, %v183, %v186
    %v206 = vsel %vm196, %v192, 1326507024
    %v207 = vsel %vm195, %v189, %v206
    %v208 = vsel %vm194, %v205, %v207
    %v209 = vshll.u32 %v169, 8
    %v210 = vmul.u32.u64.compose %v209, %v208
    %v211 = vextract.low.u32 %v210
    %v212 = vextract.high.u32 %v210
    %v213 = vmul.u32.u64.compose %v209, %v204
    %v214 = vextract.low.u32 %v213
    %v215 = vextract.high.u32 %v213
    %v216 = vmul.u32 %v209, %v200
    %v217 = vadd.s32 %v212, %v214
    %vm218 = vc.u32 %v212, %v214
    %v219 = vadd.s32 %v215, 1
    %v220 = vsel %vm218, %v219, %v215
    %v221 = vadd.s32 %v216, %v220
    %v222 = vadd.s32 %v221, 536870912
    %v223 = vshrl.u32 %v222, 30
    %v224 = vshll.u32 %v223, 30
    %v225 = vsub.s32 %v221, %v224
    %vm226 = vcmp.lt.s32.totalorder %v225, 0
    %v227 = vsub.s32 0, %v225
    %v228 = vsel %vm226, %v227, %v225
    %v229 = vclz %v228
    %v230 = vsub.s32 %v229, 2
    %vm231 = vcmp.gt.s32.totalorder 0, %v230
    %v232 = vsel %vm231, 0, %v230
    %v233 = vsub.s32 32, %v232
    %v234 = vshll.u32 %v225, %v232
    %v235 = vshrl.u32 %v217, %v233
    %v236 = vor.u32 %v234, %v235
    %v237 = vsub.s32 4294967266, %v232
    %v238 = vadd.s32 %v237, 127
    %v239 = vshll.u32 %v238, 23
    %v240 = vor.u32 4788187, %v239
    %v241 = vand.u32 2147483647, %v240
    %v243 = vcvt.s32.f32 %v236
    %v244 = vmul.f32 %v243, %v241
    %v245 = vxor.u32 %v244, 2147483648
    %v246 = vsel %vm163, %v245, %v244
    %v247 = vsub.s32 4, %v223
    %v248 = vsel %vm163, %v247, %v223
    %v249 = vsel %vm162, %v157, %v246
    %v250 = vsel %vm162, 0, %v248
    %v251 = vcosq.f32.pop %v249
    %v252 = vsinq.f32.pop %v249
    %vm253 = vweird.f32 %v157
    %v254 = vadd.s32 %v250, 3
    %v255 = vand.u32 %v254, 3
    %vm256 = vcmp.lt.s32.totalorder %v255, 2
    %vm257 = vcmp.eq.s32.totalorder %v255, 0
    %v258 = vxor.u32 %v252, 2147483648
    %v259 = vsel %vm257, %v251, %v258
    %vm260 = vcmp.eq.s32.totalorder %v255, 2
    %v261 = vxor.u32 %v251, 2147483648
    %v262 = vsel %vm260, %v261, %v252
    %v263 = vsel %vm256, %v259, %v262
    %v264 = vsel %vm253, nan, %v263
    %v265 = vand.u32 2147483647, %v159
    %vm266 = vcmp.le.f32.partialorder %v265, 0.7853982
    %vm267 = vcmp.lt.s32.totalorder %v159, 0
    %v268 = vand.u32 %v159, 2139095040
    %v269 = vshrl.u32 %v268, 23
    %v270 = vsub.s32 %v269, 127
    %v271 = vand.u32 2147483647, %v159
    %v272 = vand.u32 %v271, 8388607
    %v273 = vor.u32 %v272, 8388608
    %v274 = vsub.s32 0, %v273
    %v275 = vadd.s32 %v270, 1
    %vm276 = vcmp.gt.s32.totalorder %v275, 0
    %v277 = vsel %vm276, %v275, 0
    %v278 = vshrl.u32 %v277, 5
    %v279 = vand.u32 %v277, 31
    %v280 = vsub.s32 32, %v279
    %v281 = vshrl.u32 683565275, %v280
    %v282 = vshll.u32 683565275, %v279
    %v283 = vshrl.u32 2475754826, %v280
    %v284 = vor.u32 %v282, %v283
    %v285 = vshll.u32 2475754826, %v279
    %v286 = vshrl.u32 2131351028, %v280
    %v287 = vor.u32 %v285, %v286
    %v288 = vshll.u32 2131351028, %v279
    %v289 = vshrl.u32 2102212464, %v280
    %v290 = vor.u32 %v288, %v289
    %v291 = vshll.u32 2102212464, %v279
    %v292 = vshrl.u32 920167782, %v280
    %v293 = vor.u32 %v291, %v292
    %v294 = vshll.u32 920167782, %v279
    %v295 = vshrl.u32 1326507024, %v280
    %v296 = vor.u32 %v294, %v295
    %vm297 = vcmp.lt.s32.totalorder %v278, 1
    %vm298 = vcmp.lt.s32.totalorder %v278, 2
    %vm299 = vcmp.lt.s32.totalorder %v278, 3
    %vm300 = vcmp.lt.s32.totalorder %v278, 4
    %v301 = vsel %vm297, %v281, %v284
    %v302 = vsel %vm300, %v290, 2102212464
    %v303 = vsel %vm299, %v287, %v302
    %v304 = vsel %vm298, %v301, %v303
    %v305 = vsel %vm297, %v284, %v287
    %v306 = vsel %vm300, %v293, 920167782
    %v307 = vsel %vm299, %v290, %v306
    %v308 = vsel %vm298, %v305, %v307
    %v309 = vsel %vm297, %v287, %v290
    %v310 = vsel %vm300, %v296, 1326507024
    %v311 = vsel %vm299, %v293, %v310
    %v312 = vsel %vm298, %v309, %v311
    %v313 = vshll.u32 %v273, 8
    %v314 = vmul.u32.u64.compose %v313, %v312
    %v315 = vextract.low.u32 %v314
    %v316 = vextract.high.u32 %v314
    %v317 = vmul.u32.u64.compose %v313, %v308
    %v318 = vextract.low.u32 %v317
    %v319 = vextract.high.u32 %v317
    %v320 = vmul.u32 %v313, %v304
    %v321 = vadd.s32 %v316, %v318
    %vm322 = vc.u32 %v316, %v318
    %v323 = vadd.s32 %v319, 1
    %v324 = vsel %vm322, %v323, %v319
    %v325 = vadd.s32 %v320, %v324
    %v326 = vadd.s32 %v325, 536870912
    %v327 = vshrl.u32 %v326, 30
    %v328 = vshll.u32 %v327, 30
    %v329 = vsub.s32 %v325, %v328
    %vm330 = vcmp.lt.s32.totalorder %v329, 0
    %v331 = vsub.s32 0, %v329
    %v332 = vsel %vm330, %v331, %v329
    %v333 = vclz %v332
    %v334 = vsub.s32 %v333, 2
    %vm335 = vcmp.gt.s32.totalorder 0, %v334
    %v336 = vsel %vm335, 0, %v334
    %v337 = vsub.s32 32, %v336
    %v338 = vshll.u32 %v329, %v336
    %v339 = vshrl.u32 %v321, %v337
    %v340 = vor.u32 %v338, %v339
    %v341 = vsub.s32 4294967266, %v336
    %v342 = vadd.s32 %v341, 127
    %v343 = vshll.u32 %v342, 23
    %v344 = vor.u32 4788187, %v343
    %v345 = vand.u32 2147483647, %v344
    %v347 = vcvt.s32.f32 %v340
    %v348 = vmul.f32 %v347, %v345
    %v349 = vxor.u32 %v348, 2147483648
    %v350 = vsel %vm267, %v349, %v348
    %v351 = vsub.s32 4, %v327
    %v352 = vsel %vm267, %v351, %v327
    %v353 = vsel %vm266, %v159, %v350
    %v354 = vsel %vm266, 0, %v352
    %v355 = vcosq.f32.pop %v353
    %v356 = vsinq.f32.pop %v353
    %vm357 = vweird.f32 %v159
    %v358 = vadd.s32 %v354, 3
    %v359 = vand.u32 %v358, 3
    %vm360 = vcmp.lt.s32.totalorder %v359, 2
    %vm361 = vcmp.eq.s32.totalorder %v359, 0
    %v362 = vxor.u32 %v356, 2147483648
    %v363 = vsel %vm361, %v355, %v362
    %vm364 = vcmp.eq.s32.totalorder %v359, 2
    %v365 = vxor.u32 %v355, 2147483648
    %v366 = vsel %vm364, %v365, %v356
    %v367 = vsel %vm360, %v363, %v366
    %v368 = vsel %vm357, nan, %v367
    %s369 = sld [smem:[#allocation2]]
    %v370 = vstv %s369
    %v371 = vmul.f32 %v264, %v370
    %v372 = vmul.f32 %v368, %v370
    %373 = vst [vmem:[#allocation8] sm:$0xff] %v371
    %374 = vst [vmem:[#allocation8 + $0x8] sm:$0xff] %v372
    // Predicated region
    $region26: #{tpu_custom_call.1} parent=1 // pred_check
      _
    $region27: #{tpu_custom_call.1} parent=1 // pred_check_branch
      %376 = sbr.rel (0) target = $region29
    $region28: #{tpu_custom_call.1} parent=1 // pred_region
      %s378 = ssub.s32 256, 256
      %379 = vsyncadd [#allocation5], %s378
      %s381 = sshll.u32 [#allocation8], 4
      %s382 = int_to_ptr.vmem [resolvable:$true] %s381
      %384 = dma.vmem_to_hbm [thread:$0]  %s382, 256, %s4, [#allocation5]
    $region29: #{tpu_custom_call.1} parent=1 // pred_fallthru
      _
    // Predicated region
    $region30: #{tpu_custom_call.1} parent=1 // pred_check
      _
    $region31: #{tpu_custom_call.1} parent=1 // pred_check_branch
      %386 = sbr.rel (0) target = $region33
    $region32: #{tpu_custom_call.1} parent=1 // pred_region
      %387 = dma.done [#allocation5], 256
    $region33: #{tpu_custom_call.1} parent=1 // pred_fallthru
      _
    %388 = vsyncpa [#allocation4], 1
    %389 = vsyncpa [#allocation7], 1
    %390 = vsyncpa [#allocation5], 1

</llo_original>
